<compile_context>
chip_gen: v5e
topology: v5e:2x2
jax: 0.10.0
libtpu: 0.0.40
codegen_flags: <defaults>
</compile_context>

<pallas_src>
import functools

import jax
import jax.numpy as jnp
from jax.experimental import pallas as pl
from jax.experimental.pallas import tpu as pltpu


LN_EPS = 1e-5  # torch.nn.LayerNorm default


def _round_up(x, m):
    return ((x + m - 1) // m) * m


def _cdiv(a, b):
    return (a + b - 1) // b


# ---------------------------------------------------------------------------
# Kernels
# ---------------------------------------------------------------------------

def _layernorm_f32(x, gamma_ref, beta_ref, d_valid):
    """LayerNorm over the last axis, stats over the true d_valid lanes.

    Padded lanes of x are zero, so full-row sums equal the valid-lane sums; the
    padded lanes of gamma/beta are zero, so the normalized output is zero there
    and the (zero) padded K rows of W^T stay inert.
    """
    inv_d = jnp.float32(1.0 / d_valid)
    mean = jnp.sum(x, axis=-1, keepdims=True) * inv_d
    var = jnp.maximum(jnp.sum(x * x, axis=-1, keepdims=True) * inv_d - mean * mean, 0.0)
    inv = jax.lax.rsqrt(var + LN_EPS)
    return (x - mean) * inv * gamma_ref[...].astype(jnp.float32) + beta_ref[...].astype(jnp.float32)


def prenorm_resident_kernel(x_ref, gamma_ref, beta_ref, w_ref, bias_ref, o_ref,
                            *, d_valid, compute_dtype):
    """1-D grid over row tiles; full W^T resident in VMEM."""
    x = x_ref[...].astype(jnp.float32)                       # (TM, Dp)
    y = _layernorm_f32(x, gamma_ref, beta_ref, d_valid)
    y = y.astype(compute_dtype)
    out = jnp.dot(y, w_ref[...], preferred_element_type=jnp.float32)
    out = out + bias_ref[...].astype(jnp.float32)
    o_ref[...] = out.astype(o_ref.dtype)


def prenorm_tiled_kernel(x_ref, gamma_ref, beta_ref, w_ref, bias_ref, o_ref,
                         y_cache, *, d_valid):
    """2-D grid (row tiles x column tiles); LN computed once per row tile and
    cached in VMEM scratch, reused for every column tile."""
    @pl.when(pl.program_id(1) == 0)
    def _():
        x = x_ref[...].astype(jnp.float32)
        y = _layernorm_f32(x, gamma_ref, beta_ref, d_valid)
        y_cache[...] = y.astype(y_cache.dtype)

    out = jnp.dot(y_cache[...], w_ref[...], preferred_element_type=jnp.float32)
    out = out + bias_ref[...].astype(jnp.float32)
    o_ref[...] = out.astype(o_ref.dtype)


# ---------------------------------------------------------------------------
# Wrapper
# ---------------------------------------------------------------------------

@functools.partial(jax.jit,
                   static_argnames=("tile_rows", "tile_n", "mxu_dtype", "force_tiled"))
def prenorm_forward(x, gamma, beta, weight, bias, *, tile_rows=256, tile_n=None,
                    mxu_dtype=None, force_tiled=False):
    """x: (B, N, D); gamma/beta: (D,); weight: (D_out, D_in) torch convention; bias: (D_out,).

    mxu_dtype: optional dtype string (e.g. "bfloat16") to feed the MXU narrower
    operands than the stored weight dtype (accuracy opt-in, helps v5e).
    """
    B, N, D = x.shape
    D_out, D_in = weight.shape
    assert D_in == D
    M = B * N

    compute_dtype = jnp.dtype(mxu_dtype) if mxu_dtype is not None else weight.dtype

    # Lane-dense padding (multiples of 128 on the last dims) only when needed.
    Dp = _round_up(D, 128)
    Np = _round_up(D_out, 128)

    # Row tile: multiple of 128. Shrink so the parallel row axis gets >=2 steps
    # when possible (v7x has 2 TensorCores). Rows are NOT padded: the grid uses
    # cdiv(M, tm) and Pallas masks the trailing partial block (LN is row-local,
    # so garbage rows in the last tile are discarded on store).
    tm = min(_round_up(max(tile_rows, 128), 128), _round_up(M, 128))
    if _cdiv(M, tm) < 2 and M > 128:
        tm = _round_up(_cdiv(M, 2), 128)
    num_row_tiles = _cdiv(M, tm)

    # Operand prep (no row padding; lane padding only when misaligned).
    x2d = x.reshape(M, D)
    gamma2d = gamma.reshape(1, D)
    beta2d = beta.reshape(1, D)
    if Dp != D:
        x2d = jnp.pad(x2d, ((0, 0), (0, Dp - D)))
        gamma2d = jnp.pad(gamma2d, ((0, 0), (0, Dp - D)))
        beta2d = jnp.pad(beta2d, ((0, 0), (0, Dp - D)))
    w_t = weight.T.astype(compute_dtype)                       # (D, D_out) -> MXU dtype
    bias2d = bias.reshape(1, D_out)
    if (Dp, Np) != (D, D_out):
        w_t = jnp.pad(w_t, ((0, Dp - D), (0, Np - D_out)))
    if Np != D_out:
        bias2d = jnp.pad(bias2d, ((0, 0), (0, Np - D_out)))

    xb = jnp.dtype(x.dtype).itemsize
    wb = jnp.dtype(compute_dtype).itemsize
    ob = jnp.dtype(x.dtype).itemsize
    vmem_cap = 48 << 20  # headroom below v7x's 64 MiB physical VMEM

    # VMEM cost of the resident-weight plan: double-buffered x/out tiles, the
    # full W^T slab (budgeted 2x to be safe), params, f32 intermediates.
    resident_bytes = (2 * tm * Dp * xb + 2 * tm * Np * ob + 2 * Dp * Np * wb
                      + 4 * (Dp + Np) * 4 + (tm * Dp + tm * Np) * 4 + tm * Dp * wb)

    use_tiled = bool(force_tiled) or resident_bytes > vmem_cap

    if not use_tiled:
        # --- Primary path: W^T fully VMEM-resident, grid only over row tiles.
        kernel = functools.partial(prenorm_resident_kernel,
                                   d_valid=D, compute_dtype=compute_dtype)
        out2d = pl.pallas_call(
            kernel,
            out_shape=jax.ShapeDtypeStruct((M, Np), x.dtype),
            grid_spec=pltpu.PrefetchScalarGridSpec(
                num_scalar_prefetch=0,
                grid=(num_row_tiles,),
                in_specs=[
                    pl.BlockSpec((tm, Dp), lambda i: (i, 0)),   # x row tile
                    pl.BlockSpec((1, Dp), lambda i: (0, 0)),    # gamma (invariant)
                    pl.BlockSpec((1, Dp), lambda i: (0, 0)),    # beta  (invariant)
                    pl.BlockSpec((Dp, Np), lambda i: (0, 0)),   # full W^T, resident
                    pl.BlockSpec((1, Np), lambda i: (0, 0)),    # bias  (invariant)
                ],
                out_specs=pl.BlockSpec((tm, Np), lambda i: (i, 0)),
            ),
            compiler_params=pltpu.CompilerParams(
                dimension_semantics=("parallel",),
                vmem_limit_bytes=int(min(max(2 * resident_bytes, 32 << 20), vmem_cap)),
            ),
        )(x2d, gamma2d, beta2d, w_t, bias2d)
    else:
        # --- Fallback: very large D_out. Column axis "arbitrary", LN cached.
        if tile_n is None:
            tn = next(c for c in (1024, 512, 256, 128) if Np % c == 0)
        else:
            tn = tile_n
        assert Np % tn == 0 and tn % 128 == 0
        tiled_bytes = (2 * tm * Dp * xb + 2 * tm * tn * ob + 2 * Dp * tn * wb
                       + tm * Dp * wb + (tm * Dp + tm * tn) * 4 + 4 * (Dp + tn) * 4)
        kernel = functools.partial(prenorm_tiled_kernel, d_valid=D)
        out2d = pl.pallas_call(
            kernel,
            out_shape=jax.ShapeDtypeStruct((M, Np), x.dtype),
            grid_spec=pltpu.PrefetchScalarGridSpec(
                num_scalar_prefetch=0,
                grid=(num_row_tiles, Np // tn),
                in_specs=[
                    pl.BlockSpec((tm, Dp), lambda i, j: (i, 0)),
                    pl.BlockSpec((1, Dp), lambda i, j: (0, 0)),
                    pl.BlockSpec((1, Dp), lambda i, j: (0, 0)),
                    pl.BlockSpec((Dp, tn), lambda i, j: (0, j)),
                    pl.BlockSpec((1, tn), lambda i, j: (0, j)),
                ],
                out_specs=pl.BlockSpec((tm, tn), lambda i, j: (i, j)),
                scratch_shapes=[pltpu.VMEM((tm, Dp), compute_dtype)],  # LN cache
            ),
            compiler_params=pltpu.CompilerParams(
                dimension_semantics=("parallel", "arbitrary"),
                vmem_limit_bytes=int(min(max(2 * tiled_bytes, 32 << 20), vmem_cap)),
            ),
        )(x2d, gamma2d, beta2d, w_t, bias2d)

    if Np != D_out:
        out2d = out2d[:, :D_out]
    return out2d.reshape(B, N, D_out)


def reference_forward(x, gamma, beta, weight, bias):
    """Pure-JAX reference matching torch semantics: fn(LayerNorm(x)), fn = Linear."""
    xf = x.astype(jnp.float32)
    mean = jnp.mean(xf, axis=-1, keepdims=True)
    var = jnp.mean((xf - mean) ** 2, axis=-1, keepdims=True)
    xn = (xf - mean) * jax.lax.rsqrt(var + LN_EPS)
    y = xn * gamma.astype(jnp.float32) + beta.astype(jnp.float32)
    out = y @ weight.T.astype(jnp.float32) + bias.astype(jnp.float32)
    return out.astype(x.dtype)


# TODO(synk): `fn` in PreNorm is an arbitrary sub-module (Attention / FeedForward);
# here it is instantiated as a representative Linear and fused with the LayerNorm.

if __name__ == "__main__":
    key = jax.random.PRNGKey(0)
    k_x, k_g, k_b, k_w, k_bb, k_x2, k_w2, k_bb2 = jax.random.split(key, 8)

    # ---- Case 1: f32 model, unaligned dim (D=32 -> lane padding path), resident W^T.
    B, N, D = 2, 8, 32
    x = jax.random.normal(k_x, (B, N, D), dtype=jnp.float32)
    gamma = jnp.ones((D,), jnp.float32) + 0.01 * jax.random.normal(k_g, (D,), jnp.float32)
    beta = 0.01 * jax.random.normal(k_b, (D,), jnp.float32)
    weight = 0.05 * jax.random.normal(k_w, (D, D), jnp.float32)   # fn = Linear(dim, dim)
    bias = 0.01 * jax.random.normal(k_bb, (D,), jnp.float32)

    out = jax.block_until_ready(prenorm_forward(x, gamma, beta, weight, bias))
    ref = reference_forward(x, gamma, beta, weight, bias)
    assert out.shape == (B, N, D)
    assert jnp.allclose(out, ref, atol=1e-4, rtol=1e-4), "f32 mismatch vs reference"

    # ---- Case 2: bf16 model (LN stays f32 in-kernel, MXU fed bf16 operands).
    xb = x.astype(jnp.bfloat16)
    out_bf16 = jax.block_until_ready(
        prenorm_forward(xb, gamma.astype(jnp.bfloat16), beta.astype(jnp.bfloat16),
                        weight.astype(jnp.bfloat16), bias.astype(jnp.bfloat16)))
    ref_bf16 = reference_forward(xb, gamma.astype(jnp.bfloat16), beta.astype(jnp.bfloat16),
                                 weight.astype(jnp.bfloat16), bias.astype(jnp.bfloat16))
    assert jnp.allclose(out_bf16.astype(jnp.float32), ref_bf16.astype(jnp.float32),
                        atol=3e-2, rtol=3e-2), "bf16 mismatch vs reference"

    # ---- Case 3: aligned dims (no padding copies at all), forced column-tiled
    #      fallback with LN cache (2 column tiles) and a partial trailing row block.
    D3, D3_out = 128, 256
    x3 = jax.random.normal(k_x2, (B, N, D3), dtype=jnp.float32)
    gamma3 = jnp.ones((D3,), jnp.float32)
    beta3 = jnp.zeros((D3,), jnp.float32)
    weight3 = 0.05 * jax.random.normal(k_w2, (D3_out, D3), dtype=jnp.float32)
    bias3 = 0.01 * jax.random.normal(k_bb2, (D3_out,), dtype=jnp.float32)
    out3 = jax.block_until_ready(
        prenorm_forward(x3, gamma3, beta3, weight3, bias3, force_tiled=True, tile_n=128))
    ref3 = reference_forward(x3, gamma3, beta3, weight3, bias3)
    assert out3.shape == (B, N, D3_out)
    assert jnp.allclose(out3, ref3, atol=1e-4, rtol=1e-4), "tiled-path mismatch vs reference"

    # ---- Case 4: f32 model with opt-in bf16 MXU feed (v5e knob), looser tolerance.
    out4 = jax.block_until_ready(
        prenorm_forward(x, gamma, beta, weight, bias, mxu_dtype="bfloat16"))
    assert jnp.allclose(out4, ref, atol=3e-2, rtol=3e-2), "bf16-MXU-feed mismatch vs reference"

    print("KERNEL_OK")
</pallas_src>

<mosaic_0001>
module attributes {stable_mosaic.version = 11 : i64} {
  func.func @prenorm_resident_kernel(%arg0: i32, %arg1: memref<128x128xf32, #tpu.memory_space<vmem>>, %arg2: memref<1x128xf32, #tpu.memory_space<vmem>>, %arg3: memref<1x128xf32, #tpu.memory_space<vmem>>, %arg4: memref<128x128xf32, #tpu.memory_space<vmem>>, %arg5: memref<1x128xf32, #tpu.memory_space<vmem>>, %arg6: memref<128x128xf32, #tpu.memory_space<vmem>>) attributes {dimension_semantics = [#tpu.dimension_semantics<parallel>], iteration_bounds = array<i64: 1>, scalar_prefetch = 0 : i64, scratch_operands = 0 : i64, tpu.core_type = #tpu.core_type<tc>, window_params = [{transform_indices = @transform_0, window_bounds = array<i64: 128, 128>}, {pipeline_mode = #tpu.pipeline_mode<synchronous>, transform_indices = @transform_1, window_bounds = array<i64: 1, 128>}, {pipeline_mode = #tpu.pipeline_mode<synchronous>, transform_indices = @transform_2, window_bounds = array<i64: 1, 128>}, {pipeline_mode = #tpu.pipeline_mode<synchronous>, transform_indices = @transform_3, window_bounds = array<i64: 128, 128>}, {pipeline_mode = #tpu.pipeline_mode<synchronous>, transform_indices = @transform_4, window_bounds = array<i64: 1, 128>}, {transform_indices = @transform_5, window_bounds = array<i64: 128, 128>}]} {
    %c0 = arith.constant 0 : index
    %c0_0 = arith.constant 0 : index
    %0 = vector.load %arg1[%c0, %c0_0] : memref<128x128xf32, #tpu.memory_space<vmem>>, vector<128x128xf32>
    %cst = arith.constant dense<0.000000e+00> : vector<128xf32>
    %1 = vector.multi_reduction <add>, %0, %cst [1] : vector<128x128xf32> to vector<128xf32>
    %2 = vector.shape_cast %1 : vector<128xf32> to vector<128x1xf32>
    %cst_1 = arith.constant 3.125000e-02 : f32
    %3 = vector.broadcast %cst_1 : f32 to vector<128x1xf32>
    %4 = arith.mulf %2, %3 : vector<128x1xf32>
    %5 = arith.mulf %0, %0 : vector<128x128xf32>
    %cst_2 = arith.constant dense<0.000000e+00> : vector<128xf32>
    %6 = vector.multi_reduction <add>, %5, %cst_2 [1] : vector<128x128xf32> to vector<128xf32>
    %7 = vector.shape_cast %6 : vector<128xf32> to vector<128x1xf32>
    %cst_3 = arith.constant 3.125000e-02 : f32
    %8 = vector.broadcast %cst_3 : f32 to vector<128x1xf32>
    %9 = arith.mulf %7, %8 : vector<128x1xf32>
    %10 = arith.mulf %4, %4 : vector<128x1xf32>
    %11 = arith.subf %9, %10 : vector<128x1xf32>
    %cst_4 = arith.constant 0.000000e+00 : f32
    %12 = vector.broadcast %cst_4 : f32 to vector<128x1xf32>
    %13 = arith.maximumf %11, %12 : vector<128x1xf32>
    %cst_5 = arith.constant 9.99999974E-6 : f32
    %14 = vector.broadcast %cst_5 : f32 to vector<128x1xf32>
    %15 = arith.addf %13, %14 : vector<128x1xf32>
    %16 = math.rsqrt %15 : vector<128x1xf32>
    %17 = vector.broadcast %4 : vector<128x1xf32> to vector<128x128xf32>
    %18 = arith.subf %0, %17 : vector<128x128xf32>
    %19 = vector.broadcast %16 : vector<128x1xf32> to vector<128x128xf32>
    %20 = arith.mulf %18, %19 : vector<128x128xf32>
    %c0_6 = arith.constant 0 : index
    %c0_7 = arith.constant 0 : index
    %21 = vector.load %arg2[%c0_6, %c0_7] : memref<1x128xf32, #tpu.memory_space<vmem>>, vector<1x128xf32>
    %22 = vector.broadcast %21 : vector<1x128xf32> to vector<128x128xf32>
    %23 = arith.mulf %20, %22 : vector<128x128xf32>
    %c0_8 = arith.constant 0 : index
    %c0_9 = arith.constant 0 : index
    %24 = vector.load %arg3[%c0_8, %c0_9] : memref<1x128xf32, #tpu.memory_space<vmem>>, vector<1x128xf32>
    %25 = vector.broadcast %24 : vector<1x128xf32> to vector<128x128xf32>
    %26 = arith.addf %23, %25 : vector<128x128xf32>
    %c0_10 = arith.constant 0 : index
    %c0_11 = arith.constant 0 : index
    %27 = vector.load %arg4[%c0_10, %c0_11] : memref<128x128xf32, #tpu.memory_space<vmem>>, vector<128x128xf32>
    %cst_12 = arith.constant dense<0.000000e+00> : vector<128x128xf32>
    %28 = tpu.matmul %26, %27, %cst_12 {dimension_numbers = #tpu.dot_dimension_numbers<[1], [0], [0], [1], [0, 0, 1, 1], [], []>} : vector<128x128xf32>, vector<128x128xf32>, vector<128x128xf32> -> vector<128x128xf32>
    %c0_13 = arith.constant 0 : index
    %c0_14 = arith.constant 0 : index
    %29 = vector.load %arg5[%c0_13, %c0_14] : memref<1x128xf32, #tpu.memory_space<vmem>>, vector<1x128xf32>
    %30 = vector.broadcast %29 : vector<1x128xf32> to vector<128x128xf32>
    %31 = arith.addf %28, %30 : vector<128x128xf32>
    %c0_15 = arith.constant 0 : index
    %c0_16 = arith.constant 0 : index
    %32 = vector.load %arg6[%c0_15, %c0_16] : memref<128x128xf32, #tpu.memory_space<vmem>>, vector<128x128xf32>
    tpu.vector_store %arg6[%c0_15, %c0_16], %31 {strides = array<i32>} : memref<128x128xf32, #tpu.memory_space<vmem>>, vector<128x128xf32>,
    return
  }
  func.func @transform_0(%arg0: i32) -> (i32, i32) {
    %c0_i32 = arith.constant 0 : i32
    %c0_i32_0 = arith.constant 0 : i32
    return %arg0, %c0_i32 : i32, i32
  }
  func.func @transform_1(%arg0: i32) -> (i32, i32) {
    %c0_i32 = arith.constant 0 : i32
    %c0_i32_0 = arith.constant 0 : i32
    %c0_i32_1 = arith.constant 0 : i32
    return %c0_i32, %c0_i32_0 : i32, i32
  }
  func.func @transform_2(%arg0: i32) -> (i32, i32) {
    %c0_i32 = arith.constant 0 : i32
    %c0_i32_0 = arith.constant 0 : i32
    %c0_i32_1 = arith.constant 0 : i32
    return %c0_i32, %c0_i32_0 : i32, i32
  }
  func.func @transform_3(%arg0: i32) -> (i32, i32) {
    %c0_i32 = arith.constant 0 : i32
    %c0_i32_0 = arith.constant 0 : i32
    %c0_i32_1 = arith.constant 0 : i32
    return %c0_i32, %c0_i32_0 : i32, i32
  }
  func.func @transform_4(%arg0: i32) -> (i32, i32) {
    %c0_i32 = arith.constant 0 : i32
    %c0_i32_0 = arith.constant 0 : i32
    %c0_i32_1 = arith.constant 0 : i32
    return %c0_i32, %c0_i32_0 : i32, i32
  }
  func.func @transform_5(%arg0: i32) -> (i32, i32) {
    %c0_i32 = arith.constant 0 : i32
    %c0_i32_0 = arith.constant 0 : i32
    return %arg0, %c0_i32 : i32, i32
  }
}

</mosaic_0001>

<llo_original>
// kernel: prenorm_forward.1
$region0: #{prenorm_forward.1}
  #allocation0 [shape = 'u32[]', space=smem, size = 0x4, offset = 0x4, fixed_abs, tag = 'smem constant byte address 0x4 - core index']
  #allocation1 [shape = 'u32[72,128]{1,0:T(1,128)}', space=vmem, size = 0x9000, scoped, tag = 'internal scratch']
  %s0 = inlined_call_operand.vmem [shape: f32[16,128], index: 0, kind: input, shape index: {}]
  %s1 = inlined_call_operand.vmem [shape: f32[1,128], index: 1, kind: input, shape index: {}]
  %s2 = inlined_call_operand.vmem [shape: f32[1,128], index: 2, kind: input, shape index: {}]
  %s3 = inlined_call_operand.vmem [shape: f32[128,128], index: 3, kind: input, shape index: {}]
  %s4 = inlined_call_operand.vmem [shape: f32[1,128], index: 4, kind: input, shape index: {}]
  %s5 = inlined_call_operand.vmem [shape: f32[16,128], index: 5, kind: output, shape index: {}]
  %s6 = sld [smem:[#allocation0]]
  $region64: #{prenorm_forward.1} parent=0
    _
  %s8 = ssub.s32 1, %s6
  %s9 = scalar_select 0, %s8, %s6
  $region1: #{prenorm_forward.1} parent=0
    #allocation2 [shape = 'u8[65536]{0}', space=vmem, size = 0x10000, scoped, tag = 'output window, operand 0, single buffered']
    // Predicated region
    $region2: #{prenorm_forward.1} parent=1 // pred_check
      _
    $region3: #{prenorm_forward.1} parent=1 // pred_check_branch
      %11 = sbr.rel (0) target = $region5
    $region4: #{prenorm_forward.1} parent=1 // pred_region
      _
    $region5: #{prenorm_forward.1} parent=1 // pred_fallthru
      _
    // Predicated region
    $region6: #{prenorm_forward.1} parent=1 // pred_check
      _
    $region7: #{prenorm_forward.1} parent=1 // pred_check_branch
      %13 = sbr.rel (0) target = $region9
    $region8: #{prenorm_forward.1} parent=1 // pred_region
      _
    $region9: #{prenorm_forward.1} parent=1 // pred_fallthru
      _
    // Predicated region
    $region10: #{prenorm_forward.1} parent=1 // pred_check
      _
    $region11: #{prenorm_forward.1} parent=1 // pred_check_branch
      %15 = sbr.rel (0) target = $region13
    $region12: #{prenorm_forward.1} parent=1 // pred_region
      _
    $region13: #{prenorm_forward.1} parent=1 // pred_fallthru
      _
    // Predicated region
    $region14: #{prenorm_forward.1} parent=1 // pred_check
      _
    $region15: #{prenorm_forward.1} parent=1 // pred_check_branch
      %17 = sbr.rel (0) target = $region17
    $region16: #{prenorm_forward.1} parent=1 // pred_region
      _
    $region17: #{prenorm_forward.1} parent=1 // pred_fallthru
      _
    // Predicated region
    $region18: #{prenorm_forward.1} parent=1 // pred_check
      _
    $region19: #{prenorm_forward.1} parent=1 // pred_check_branch
      %19 = sbr.rel (0) target = $region21
    $region20: #{prenorm_forward.1} parent=1 // pred_region
      _
    $region21: #{prenorm_forward.1} parent=1 // pred_fallthru
      _
    %v20 = vld [vmem:[%s0] sm:$0xff]
    %v21 = vld [vmem:[%s0 + $0x8] sm:$0xff]
    %v22 = vld [vmem:[%s0 + $0x10] sm:$0xff]
    %v23 = vld [vmem:[%s0 + $0x18] sm:$0xff]
    %v24 = vld [vmem:[%s0 + $0x20] sm:$0xff]
    %v25 = vld [vmem:[%s0 + $0x28] sm:$0xff]
    %v26 = vld [vmem:[%s0 + $0x30] sm:$0xff]
    %v27 = vld [vmem:[%s0 + $0x38] sm:$0xff]
    %v28 = vld [vmem:[%s0 + $0x40] sm:$0xff]
    %v29 = vld [vmem:[%s0 + $0x48] sm:$0xff]
    %v30 = vld [vmem:[%s0 + $0x50] sm:$0xff]
    %v31 = vld [vmem:[%s0 + $0x58] sm:$0xff]
    %v32 = vld [vmem:[%s0 + $0x60] sm:$0xff]
    %v33 = vld [vmem:[%s0 + $0x68] sm:$0xff]
    %v34 = vld [vmem:[%s0 + $0x70] sm:$0xff]
    %v35 = vld [vmem:[%s0 + $0x78] sm:$0xff]
    %36 = vadd.xlane.f32.xlu0 %v20
    %v37 = vpop.xlane.xlu0 %36
    %38 = vadd.xlane.f32.xlu0 %v21
    %v39 = vpop.xlane.xlu0 %38
    %40 = vadd.xlane.f32.xlu0 %v22
    %v41 = vpop.xlane.xlu0 %40
    %42 = vadd.xlane.f32.xlu0 %v23
    %v43 = vpop.xlane.xlu0 %42
    %44 = vadd.xlane.f32.xlu0 %v24
    %v45 = vpop.xlane.xlu0 %44
    %46 = vadd.xlane.f32.xlu0 %v25
    %v47 = vpop.xlane.xlu0 %46
    %48 = vadd.xlane.f32.xlu0 %v26
    %v49 = vpop.xlane.xlu0 %48
    %50 = vadd.xlane.f32.xlu0 %v27
    %v51 = vpop.xlane.xlu0 %50
    %52 = vadd.xlane.f32.xlu0 %v28
    %v53 = vpop.xlane.xlu0 %52
    %54 = vadd.xlane.f32.xlu0 %v29
    %v55 = vpop.xlane.xlu0 %54
    %56 = vadd.xlane.f32.xlu0 %v30
    %v57 = vpop.xlane.xlu0 %56
    %58 = vadd.xlane.f32.xlu0 %v31
    %v59 = vpop.xlane.xlu0 %58
    %60 = vadd.xlane.f32.xlu0 %v32
    %v61 = vpop.xlane.xlu0 %60
    %62 = vadd.xlane.f32.xlu0 %v33
    %v63 = vpop.xlane.xlu0 %62
    %64 = vadd.xlane.f32.xlu0 %v34
    %v65 = vpop.xlane.xlu0 %64
    %66 = vadd.xlane.f32.xlu0 %v35
    %v67 = vpop.xlane.xlu0 %66
    %v68 = vmul.f32 %v37, 0.03125
    %v69 = vmul.f32 %v39, 0.03125
    %v70 = vmul.f32 %v41, 0.03125
    %v71 = vmul.f32 %v43, 0.03125
    %v72 = vmul.f32 %v45, 0.03125
    %v73 = vmul.f32 %v47, 0.03125
    %v74 = vmul.f32 %v49, 0.03125
    %v75 = vmul.f32 %v51, 0.03125
    %v76 = vmul.f32 %v53, 0.03125
    %v77 = vmul.f32 %v55, 0.03125
    %v78 = vmul.f32 %v57, 0.03125
    %v79 = vmul.f32 %v59, 0.03125
    %v80 = vmul.f32 %v61, 0.03125
    %v81 = vmul.f32 %v63, 0.03125
    %v82 = vmul.f32 %v65, 0.03125
    %v83 = vmul.f32 %v67, 0.03125
    %v84 = vmul.f32 %v20, %v20
    %v85 = vmul.f32 %v21, %v21
    %v86 = vmul.f32 %v22, %v22
    %v87 = vmul.f32 %v23, %v23
    %v88 = vmul.f32 %v24, %v24
    %v89 = vmul.f32 %v25, %v25
    %v90 = vmul.f32 %v26, %v26
    %v91 = vmul.f32 %v27, %v27
    %v92 = vmul.f32 %v28, %v28
    %v93 = vmul.f32 %v29, %v29
    %v94 = vmul.f32 %v30, %v30
    %v95 = vmul.f32 %v31, %v31
    %v96 = vmul.f32 %v32, %v32
    %v97 = vmul.f32 %v33, %v33
    %v98 = vmul.f32 %v34, %v34
    %v99 = vmul.f32 %v35, %v35
    %100 = vadd.xlane.f32.xlu0 %v84
    %v101 = vpop.xlane.xlu0 %100
    %102 = vadd.xlane.f32.xlu0 %v85
    %v103 = vpop.xlane.xlu0 %102
    %104 = vadd.xlane.f32.xlu0 %v86
    %v105 = vpop.xlane.xlu0 %104
    %106 = vadd.xlane.f32.xlu0 %v87
    %v107 = vpop.xlane.xlu0 %106
    %108 = vadd.xlane.f32.xlu0 %v88
    %v109 = vpop.xlane.xlu0 %108
    %110 = vadd.xlane.f32.xlu0 %v89
    %v111 = vpop.xlane.xlu0 %110
    %112 = vadd.xlane.f32.xlu0 %v90
    %v113 = vpop.xlane.xlu0 %112
    %114 = vadd.xlane.f32.xlu0 %v91
    %v115 = vpop.xlane.xlu0 %114
    %116 = vadd.xlane.f32.xlu0 %v92
    %v117 = vpop.xlane.xlu0 %116
    %118 = vadd.xlane.f32.xlu0 %v93
    %v119 = vpop.xlane.xlu0 %118
    %120 = vadd.xlane.f32.xlu0 %v94
    %v121 = vpop.xlane.xlu0 %120
    %122 = vadd.xlane.f32.xlu0 %v95
    %v123 = vpop.xlane.xlu0 %122
    %124 = vadd.xlane.f32.xlu0 %v96
    %v125 = vpop.xlane.xlu0 %124
    %126 = vadd.xlane.f32.xlu0 %v97
    %v127 = vpop.xlane.xlu0 %126
    %128 = vadd.xlane.f32.xlu0 %v98
    %v129 = vpop.xlane.xlu0 %128
    %130 = vadd.xlane.f32.xlu0 %v99
    %v131 = vpop.xlane.xlu0 %130
    %v132 = vmul.f32 %v101, 0.03125
    %v133 = vmul.f32 %v103, 0.03125
    %v134 = vmul.f32 %v105, 0.03125
    %v135 = vmul.f32 %v107, 0.03125
    %v136 = vmul.f32 %v109, 0.03125
    %v137 = vmul.f32 %v111, 0.03125
    %v138 = vmul.f32 %v113, 0.03125
    %v139 = vmul.f32 %v115, 0.03125
    %v140 = vmul.f32 %v117, 0.03125
    %v141 = vmul.f32 %v119, 0.03125
    %v142 = vmul.f32 %v121, 0.03125
    %v143 = vmul.f32 %v123, 0.03125
    %v144 = vmul.f32 %v125, 0.03125
    %v145 = vmul.f32 %v127, 0.03125
    %v146 = vmul.f32 %v129, 0.03125
    %v147 = vmul.f32 %v131, 0.03125
    %v148 = vmul.f32 %v68, %v68
    %v149 = vmul.f32 %v69, %v69
    %v150 = vmul.f32 %v70, %v70
    %v151 = vmul.f32 %v71, %v71
    %v152 = vmul.f32 %v72, %v72
    %v153 = vmul.f32 %v73, %v73
    %v154 = vmul.f32 %v74, %v74
    %v155 = vmul.f32 %v75, %v75
    %v156 = vmul.f32 %v76, %v76
    %v157 = vmul.f32 %v77, %v77
    %v158 = vmul.f32 %v78, %v78
    %v159 = vmul.f32 %v79, %v79
    %v160 = vmul.f32 %v80, %v80
    %v161 = vmul.f32 %v81, %v81
    %v162 = vmul.f32 %v82, %v82
    %v163 = vmul.f32 %v83, %v83
    %v164 = vsub.f32 %v132, %v148
    %v165 = vsub.f32 %v133, %v149
    %v166 = vsub.f32 %v134, %v150
    %v167 = vsub.f32 %v135, %v151
    %v168 = vsub.f32 %v136, %v152
    %v169 = vsub.f32 %v137, %v153
    %v170 = vsub.f32 %v138, %v154
    %v171 = vsub.f32 %v139, %v155
    %v172 = vsub.f32 %v140, %v156
    %v173 = vsub.f32 %v141, %v157
    %v174 = vsub.f32 %v142, %v158
    %v175 = vsub.f32 %v143, %v159
    %v176 = vsub.f32 %v144, %v160
    %v177 = vsub.f32 %v145, %v161
    %v178 = vsub.f32 %v146, %v162
    %v179 = vsub.f32 %v147, %v163
    %v180 = vmax.f32 %v164, 0.0
    %v181 = vmax.f32 %v165, 0.0
    %v182 = vmax.f32 %v166, 0.0
    %v183 = vmax.f32 %v167, 0.0
    %v184 = vmax.f32 %v168, 0.0
    %v185 = vmax.f32 %v169, 0.0
    %v186 = vmax.f32 %v170, 0.0
    %v187 = vmax.f32 %v171, 0.0
    %v188 = vmax.f32 %v172, 0.0
    %v189 = vmax.f32 %v173, 0.0
    %v190 = vmax.f32 %v174, 0.0
    %v191 = vmax.f32 %v175, 0.0
    %v192 = vmax.f32 %v176, 0.0
    %v193 = vmax.f32 %v177, 0.0
    %v194 = vmax.f32 %v178, 0.0
    %v195 = vmax.f32 %v179, 0.0
    %v196 = vadd.f32 %v180, 1e-05
    %v197 = vadd.f32 %v181, 1e-05
    %v198 = vadd.f32 %v182, 1e-05
    %v199 = vadd.f32 %v183, 1e-05
    %v200 = vadd.f32 %v184, 1e-05
    %v201 = vadd.f32 %v185, 1e-05
    %v202 = vadd.f32 %v186, 1e-05
    %v203 = vadd.f32 %v187, 1e-05
    %v204 = vadd.f32 %v188, 1e-05
    %v205 = vadd.f32 %v189, 1e-05
    %v206 = vadd.f32 %v190, 1e-05
    %v207 = vadd.f32 %v191, 1e-05
    %v208 = vadd.f32 %v192, 1e-05
    %v209 = vadd.f32 %v193, 1e-05
    %v210 = vadd.f32 %v194, 1e-05
    %v211 = vadd.f32 %v195, 1e-05
    %v212 = vrsqrt.pop %v196
    %v213 = vmul.f32 %v212, %v196
    %v214 = vmul.f32 %v213, %v212
    %v215 = vmul.f32 0.5, %v214
    %v216 = vsub.f32 1.5, %v215
    %v217 = vmul.f32 %v212, %v216
    %vm218 = vweird.f32 %v196
    %vm219 = vweird.f32 %v212
    %vm220 = vmor %vm218, %vm219
    %v221 = vsel %vm220, %v212, %v217
    %v222 = vrsqrt.pop %v197
    %v223 = vmul.f32 %v222, %v197
    %v224 = vmul.f32 %v223, %v222
    %v225 = vmul.f32 0.5, %v224
    %v226 = vsub.f32 1.5, %v225
    %v227 = vmul.f32 %v222, %v226
    %vm228 = vweird.f32 %v197
    %vm229 = vweird.f32 %v222
    %vm230 = vmor %vm228, %vm229
    %v231 = vsel %vm230, %v222, %v227
    %v232 = vrsqrt.pop %v198
    %v233 = vmul.f32 %v232, %v198
    %v234 = vmul.f32 %v233, %v232
    %v235 = vmul.f32 0.5, %v234
    %v236 = vsub.f32 1.5, %v235
    %v237 = vmul.f32 %v232, %v236
    %vm238 = vweird.f32 %v198
    %vm239 = vweird.f32 %v232
    %vm240 = vmor %vm238, %vm239
    %v241 = vsel %vm240, %v232, %v237
    %v242 = vrsqrt.pop %v199
    %v243 = vmul.f32 %v242, %v199
    %v244 = vmul.f32 %v243, %v242
    %v245 = vmul.f32 0.5, %v244
    %v246 = vsub.f32 1.5, %v245
    %v247 = vmul.f32 %v242, %v246
    %vm248 = vweird.f32 %v199
    %vm249 = vweird.f32 %v242
    %vm250 = vmor %vm248, %vm249
    %v251 = vsel %vm250, %v242, %v247
    %v252 = vrsqrt.pop %v200
    %v253 = vmul.f32 %v252, %v200
    %v254 = vmul.f32 %v253, %v252
    %v255 = vmul.f32 0.5, %v254
    %v256 = vsub.f32 1.5, %v255
    %v257 = vmul.f32 %v252, %v256
    %vm258 = vweird.f32 %v200
    %vm259 = vweird.f32 %v252
    %vm260 = vmor %vm258, %vm259
    %v261 = vsel %vm260, %v252, %v257
    %v262 = vrsqrt.pop %v201
    %v263 = vmul.f32 %v262, %v201
    %v264 = vmul.f32 %v263, %v262
    %v265 = vmul.f32 0.5, %v264
    %v266 = vsub.f32 1.5, %v265
    %v267 = vmul.f32 %v262, %v266
    %vm268 = vweird.f32 %v201
    %vm269 = vweird.f32 %v262
    %vm270 = vmor %vm268, %vm269
    %v271 = vsel %vm270, %v262, %v267
    %v272 = vrsqrt.pop %v202
    %v273 = vmul.f32 %v272, %v202
    %v274 = vmul.f32 %v273, %v272
    %v275 = vmul.f32 0.5, %v274
    %v276 = vsub.f32 1.5, %v275
    %v277 = vmul.f32 %v272, %v276
    %vm278 = vweird.f32 %v202
    %vm279 = vweird.f32 %v272
    %vm280 = vmor %vm278, %vm279
    %v281 = vsel %vm280, %v272, %v277
    %v282 = vrsqrt.pop %v203
    %v283 = vmul.f32 %v282, %v203
    %v284 = vmul.f32 %v283, %v282
    %v285 = vmul.f32 0.5, %v284
    %v286 = vsub.f32 1.5, %v285
    %v287 = vmul.f32 %v282, %v286
    %vm288 = vweird.f32 %v203
    %vm289 = vweird.f32 %v282
    %vm290 = vmor %vm288, %vm289
    %v291 = vsel %vm290, %v282, %v287
    %v292 = vrsqrt.pop %v204
    %v293 = vmul.f32 %v292, %v204
    %v294 = vmul.f32 %v293, %v292
    %v295 = vmul.f32 0.5, %v294
    %v296 = vsub.f32 1.5, %v295
    %v297 = vmul.f32 %v292, %v296
    %vm298 = vweird.f32 %v204
    %vm299 = vweird.f32 %v292
    %vm300 = vmor %vm298, %vm299
    %v301 = vsel %vm300, %v292, %v297
    %v302 = vrsqrt.pop %v205
    %v303 = vmul.f32 %v302, %v205
    %v304 = vmul.f32 %v303, %v302
    %v305 = vmul.f32 0.5, %v304
    %v306 = vsub.f32 1.5, %v305
    %v307 = vmul.f32 %v302, %v306
    %vm308 = vweird.f32 %v205
    %vm309 = vweird.f32 %v302
    %vm310 = vmor %vm308, %vm309
    %v311 = vsel %vm310, %v302, %v307
    %v312 = vrsqrt.pop %v206
    %v313 = vmul.f32 %v312, %v206
    %v314 = vmul.f32 %v313, %v312
    %v315 = vmul.f32 0.5, %v314
    %v316 = vsub.f32 1.5, %v315
    %v317 = vmul.f32 %v312, %v316
    %vm318 = vweird.f32 %v206
    %vm319 = vweird.f32 %v312
    %vm320 = vmor %vm318, %vm319
    %v321 = vsel %vm320, %v312, %v317
    %v322 = vrsqrt.pop %v207
    %v323 = vmul.f32 %v322, %v207
    %v324 = vmul.f32 %v323, %v322
    %v325 = vmul.f32 0.5, %v324
    %v326 = vsub.f32 1.5, %v325
    %v327 = vmul.f32 %v322, %v326
    %vm328 = vweird.f32 %v207
    %vm329 = vweird.f32 %v322
    %vm330 = vmor %vm328, %vm329
    %v331 = vsel %vm330, %v322, %v327
    %v332 = vrsqrt.pop %v208
    %v333 = vmul.f32 %v332, %v208
    %v334 = vmul.f32 %v333, %v332
    %v335 = vmul.f32 0.5, %v334
    %v336 = vsub.f32 1.5, %v335
    %v337 = vmul.f32 %v332, %v336
    %vm338 = vweird.f32 %v208
    %vm339 = vweird.f32 %v332
    %vm340 = vmor %vm338, %vm339
    %v341 = vsel %vm340, %v332, %v337
    %v342 = vrsqrt.pop %v209
    %v343 = vmul.f32 %v342, %v209
    %v344 = vmul.f32 %v343, %v342
    %v345 = vmul.f32 0.5, %v344
    %v346 = vsub.f32 1.5, %v345
    %v347 = vmul.f32 %v342, %v346
    %vm348 = vweird.f32 %v209
    %vm349 = vweird.f32 %v342
    %vm350 = vmor %vm348, %vm349
    %v351 = vsel %vm350, %v342, %v347
    %v352 = vrsqrt.pop %v210
    %v353 = vmul.f32 %v352, %v210
    %v354 = vmul.f32 %v353, %v352
    %v355 = vmul.f32 0.5, %v354
    %v356 = vsub.f32 1.5, %v355
    %v357 = vmul.f32 %v352, %v356
    %vm358 = vweird.f32 %v210
    %vm359 = vweird.f32 %v352
    %vm360 = vmor %vm358, %vm359
    %v361 = vsel %vm360, %v352, %v357
    %v362 = vrsqrt.pop %v211
    %v363 = vmul.f32 %v362, %v211
    %v364 = vmul.f32 %v363, %v362
    %v365 = vmul.f32 0.5, %v364
    %v366 = vsub.f32 1.5, %v365
    %v367 = vmul.f32 %v362, %v366
    %vm368 = vweird.f32 %v211
    %vm369 = vweird.f32 %v362
    %vm370 = vmor %vm368, %vm369
    %v371 = vsel %vm370, %v362, %v367
    %v372 = vsub.f32 %v20, %v68
    %v373 = vsub.f32 %v21, %v69
    %v374 = vsub.f32 %v22, %v70
    %v375 = vsub.f32 %v23, %v71
    %v376 = vsub.f32 %v24, %v72
    %v377 = vsub.f32 %v25, %v73
    %v378 = vsub.f32 %v26, %v74
    %v379 = vsub.f32 %v27, %v75
    %v380 = vsub.f32 %v28, %v76
    %v381 = vsub.f32 %v29, %v77
    %v382 = vsub.f32 %v30, %v78
    %v383 = vsub.f32 %v31, %v79
    %v384 = vsub.f32 %v32, %v80
    %v385 = vsub.f32 %v33, %v81
    %v386 = vsub.f32 %v34, %v82
    %v387 = vsub.f32 %v35, %v83
    %v388 = vmul.f32 %v372, %v221
    %v389 = vmul.f32 %v373, %v231
    %v390 = vmul.f32 %v374, %v241
    %v391 = vmul.f32 %v375, %v251
    %v392 = vmul.f32 %v376, %v261
    %v393 = vmul.f32 %v377, %v271
    %v394 = vmul.f32 %v378, %v281
    %v395 = vmul.f32 %v379, %v291
    %v396 = vmul.f32 %v380, %v301
    %v397 = vmul.f32 %v381, %v311
    %v398 = vmul.f32 %v382, %v321
    %v399 = vmul.f32 %v383, %v331
    %v400 = vmul.f32 %v384, %v341
    %v401 = vmul.f32 %v385, %v351
    %v402 = vmul.f32 %v386, %v361
    %v403 = vmul.f32 %v387, %v371
    %v404 = vld [vmem:[%s1] sm:$0x1]
    %v406 = vperm.slane %v404, 0
    %v408 = vmul.f32 %v388, %v406
    %v409 = vmul.f32 %v389, %v406
    %v410 = vmul.f32 %v390, %v406
    %v411 = vmul.f32 %v391, %v406
    %v412 = vmul.f32 %v392, %v406
    %v413 = vmul.f32 %v393, %v406
    %v414 = vmul.f32 %v394, %v406
    %v415 = vmul.f32 %v395, %v406
    %v416 = vmul.f32 %v396, %v406
    %v417 = vmul.f32 %v397, %v406
    %v418 = vmul.f32 %v398, %v406
    %v419 = vmul.f32 %v399, %v406
    %v420 = vmul.f32 %v400, %v406
    %v421 = vmul.f32 %v401, %v406
    %v422 = vmul.f32 %v402, %v406
    %v423 = vmul.f32 %v403, %v406
    %v424 = vld [vmem:[%s2] sm:$0x1]
    %v426 = vperm.slane %v424, 0
    %v428 = vadd.f32 %v408, %v426
    %v429 = vadd.f32 %v409, %v426
    %v430 = vadd.f32 %v410, %v426
    %v431 = vadd.f32 %v411, %v426
    %v432 = vadd.f32 %v412, %v426
    %v433 = vadd.f32 %v413, %v426
    %v434 = vadd.f32 %v414, %v426
    %v435 = vadd.f32 %v415, %v426
    %v436 = vadd.f32 %v416, %v426
    %v437 = vadd.f32 %v417, %v426
    %v438 = vadd.f32 %v418, %v426
    %v439 = vadd.f32 %v419, %v426
    %v440 = vadd.f32 %v420, %v426
    %v441 = vadd.f32 %v421, %v426
    %v442 = vadd.f32 %v422, %v426
    %v443 = vadd.f32 %v423, %v426
    %v444 = vld [vmem:[%s3] sm:$0xff]
    %v445 = vld [vmem:[%s3 + $0x8] sm:$0xff]
    %v446 = vld [vmem:[%s3 + $0x10] sm:$0xff]
    %v447 = vld [vmem:[%s3 + $0x18] sm:$0xff]
    %v448 = vld [vmem:[%s3 + $0x20] sm:$0xff]
    %v449 = vld [vmem:[%s3 + $0x28] sm:$0xff]
    %v450 = vld [vmem:[%s3 + $0x30] sm:$0xff]
    %v451 = vld [vmem:[%s3 + $0x38] sm:$0xff]
    %v452 = vld [vmem:[%s3 + $0x40] sm:$0xff]
    %v453 = vld [vmem:[%s3 + $0x48] sm:$0xff]
    %v454 = vld [vmem:[%s3 + $0x50] sm:$0xff]
    %v455 = vld [vmem:[%s3 + $0x58] sm:$0xff]
    %v456 = vld [vmem:[%s3 + $0x60] sm:$0xff]
    %v457 = vld [vmem:[%s3 + $0x68] sm:$0xff]
    %v458 = vld [vmem:[%s3 + $0x70] sm:$0xff]
    %v459 = vld [vmem:[%s3 + $0x78] sm:$0xff]
    %v460 = vld [vmem:[%s4] sm:$0x1]
    %v462 = vperm.slane %v460, 0
    %464 = vmatpush.msra.mxu0 %v459
    %465 = vmatpush.msra.mxu0 %v458
    %466 = vmatpush.msra.mxu0 %v457
    %467 = vmatpush.msra.mxu0 %v456
    %468 = vmatpush.msra.mxu0 %v455
    %469 = vmatpush.msra.mxu0 %v454
    %470 = vmatpush.msra.mxu0 %v453
    %471 = vmatpush.msra.mxu0 %v452
    %472 = vmatpush.msra.mxu0 %v451
    %473 = vmatpush.msra.mxu0 %v450
    %474 = vmatpush.msra.mxu0 %v449
    %475 = vmatpush.msra.mxu0 %v448
    %476 = vmatpush.msra.mxu0 %v447
    %477 = vmatpush.msra.mxu0 %v446
    %478 = vmatpush.msra.mxu0 %v445
    %479 = vmatpush.msra.mxu0 %v444
    %480 = vmatmul.f32.gmra.mxu0 %v428
    %v481 = vpop.f32.mrf.mxu0
    %v482 = vadd.f32 %v462, %v481
    %483 = vmatmul.f32.gmra.mxu0 %v429
    %v484 = vpop.f32.mrf.mxu0
    %v485 = vadd.f32 %v462, %v484
    %486 = vmatmul.f32.gmra.mxu0 %v430
    %v487 = vpop.f32.mrf.mxu0
    %v488 = vadd.f32 %v462, %v487
    %489 = vmatmul.f32.gmra.mxu0 %v431
    %v490 = vpop.f32.mrf.mxu0
    %v491 = vadd.f32 %v462, %v490
    %492 = vmatmul.f32.gmra.mxu0 %v432
    %v493 = vpop.f32.mrf.mxu0
    %v494 = vadd.f32 %v462, %v493
    %495 = vmatmul.f32.gmra.mxu0 %v433
    %v496 = vpop.f32.mrf.mxu0
    %v497 = vadd.f32 %v462, %v496
    %498 = vmatmul.f32.gmra.mxu0 %v434
    %v499 = vpop.f32.mrf.mxu0
    %v500 = vadd.f32 %v462, %v499
    %501 = vmatmul.f32.gmra.mxu0 %v435
    %v502 = vpop.f32.mrf.mxu0
    %v503 = vadd.f32 %v462, %v502
    %504 = vmatmul.f32.gmra.mxu0 %v436
    %v505 = vpop.f32.mrf.mxu0
    %v506 = vadd.f32 %v462, %v505
    %507 = vmatmul.f32.gmra.mxu0 %v437
    %v508 = vpop.f32.mrf.mxu0
    %v509 = vadd.f32 %v462, %v508
    %510 = vmatmul.f32.gmra.mxu0 %v438
    %v511 = vpop.f32.mrf.mxu0
    %v512 = vadd.f32 %v462, %v511
    %513 = vmatmul.f32.gmra.mxu0 %v439
    %v514 = vpop.f32.mrf.mxu0
    %v515 = vadd.f32 %v462, %v514
    %516 = vmatmul.f32.gmra.mxu0 %v440
    %v517 = vpop.f32.mrf.mxu0
    %v518 = vadd.f32 %v462, %v517
    %519 = vmatmul.f32.gmra.mxu0 %v441
    %v520 = vpop.f32.mrf.mxu0
    %v521 = vadd.f32 %v462, %v520
    %522 = vmatmul.f32.gmra.mxu0 %v442
    %v523 = vpop.f32.mrf.mxu0
    %v524 = vadd.f32 %v462, %v523
    %525 = vmatmul.f32.gmra.mxu0 %v443
    %v526 = vpop.f32.mrf.mxu0
    %v527 = vadd.f32 %v462, %v526
    %528 = vdwg.mxu0
    %529 = vst [vmem:[#allocation2] sm:$0xff] %v482
    %530 = vst [vmem:[#allocation2 + $0x8] sm:$0xff] %v485
    %531 = vst [vmem:[#allocation2 + $0x10] sm:$0xff] %v488
    %532 = vst [vmem:[#allocation2 + $0x18] sm:$0xff] %v491
    %533 = vst [vmem:[#allocation2 + $0x20] sm:$0xff] %v494
    %534 = vst [vmem:[#allocation2 + $0x28] sm:$0xff] %v497
    %535 = vst [vmem:[#allocation2 + $0x30] sm:$0xff] %v500
    %536 = vst [vmem:[#allocation2 + $0x38] sm:$0xff] %v503
    %537 = vst [vmem:[#allocation2 + $0x40] sm:$0xff] %v506
    %538 = vst [vmem:[#allocation2 + $0x48] sm:$0xff] %v509
    %539 = vst [vmem:[#allocation2 + $0x50] sm:$0xff] %v512
    %540 = vst [vmem:[#allocation2 + $0x58] sm:$0xff] %v515
    %541 = vst [vmem:[#allocation2 + $0x60] sm:$0xff] %v518
    %542 = vst [vmem:[#allocation2 + $0x68] sm:$0xff] %v521
    %543 = vst [vmem:[#allocation2 + $0x70] sm:$0xff] %v524
    %544 = vst [vmem:[#allocation2 + $0x78] sm:$0xff] %v527
    // Predicated region
    $region22: #{prenorm_forward.1} parent=1 // pred_check
      _
    $region23: #{prenorm_forward.1} parent=1 // pred_check_branch
      %546 = sbr.rel (0) target = $region25
    $region24: #{prenorm_forward.1} parent=1 // pred_region
      // Predicated region
      $region26: #{prenorm_forward.1} parent=24 // pred_check
        _
      $region27: #{prenorm_forward.1} parent=24 // pred_check_branch
        %548 = sbr.rel (0) target = $region29
      $region28: #{prenorm_forward.1} parent=24 // pred_region
        // Predicated region
        $region30: #{prenorm_forward.1} parent=28 // pred_check
          _
        $region31: #{prenorm_forward.1} parent=28 // pred_check_branch
          %550 = sbr.rel (0) target = $region33
        $region32: #{prenorm_forward.1} parent=28 // pred_region
          // Predicated region
          $region45: #{prenorm_forward.1} parent=32 // pred_check
            _
          $region46: #{prenorm_forward.1} parent=32 // pred_check_branch
            %568 = sbr.rel (0) target = $region48
          $region47: #{prenorm_forward.1} parent=32 // pred_region
            loop: start=0, step=1, limit=1
            $region49: #{prenorm_forward.1} parent=47 // loop_pre_header
              _
            $region50: #{prenorm_forward.1} parent=47 // loop_header
              %s570 = sphi 0, %s574
              %p571 = scmp.ge.s32.totalorder %s570, 1
              %s575 = sphi [#allocation2], [#allocation2]
              %s576 = sphi %s5, %s5
            $region51: #{prenorm_forward.1} parent=47 // loop_header_branch
              %573 = sbr.rel (%p571) target = $region55
            $region52: #{prenorm_forward.1} parent=47 // loop_body
              %v577 = vld [vmem:[%s575] sm:$0xff]
              %578 = vst [vmem:[%s576] sm:$0xff] %v577
              %v579 = vld [vmem:[%s575 + $0x8] sm:$0xff]
              %580 = vst [vmem:[%s576 + $0x8] sm:$0xff] %v579
            $region53: #{prenorm_forward.1} parent=47 // loop_footer
              %s574 = sadd.s32 1, %s570
            $region54: #{prenorm_forward.1} parent=47 // loop_footer_branch
              %569 = sbr.rel target = $region50
            $region55: #{prenorm_forward.1} parent=47 // loop_exit
              _
          $region48: #{prenorm_forward.1} parent=32 // pred_fallthru
            _
          // Predicated region
          $region56: #{prenorm_forward.1} parent=32 // pred_check
            _
          $region57: #{prenorm_forward.1} parent=32 // pred_check_branch
            %582 = sbr.rel target = $region59
          $region58: #{prenorm_forward.1} parent=32 // pred_region
            _
          $region59: #{prenorm_forward.1} parent=32 // pred_fallthru
            _
        $region33: #{prenorm_forward.1} parent=28 // pred_fallthru
          _
        // Predicated region
        $region34: #{prenorm_forward.1} parent=28 // pred_check
          _
        $region35: #{prenorm_forward.1} parent=28 // pred_check_branch
          %552 = sbr.rel target = $region37
        $region36: #{prenorm_forward.1} parent=28 // pred_region
          %s554 = ssub.s32 256, 1
          loop: start=0, step=1, limit=1
          $region38: #{prenorm_forward.1} parent=36 // loop_pre_header
            _
          $region39: #{prenorm_forward.1} parent=36 // loop_header
            %s556 = sphi 0, %s560
            %p557 = scmp.ge.s32.totalorder %s556, 1
            %s561 = sphi [#allocation2], [#allocation2]
            %s562 = sphi %s5, %s5
          $region40: #{prenorm_forward.1} parent=36 // loop_header_branch
            %559 = sbr.rel (%p557) target = $region44
          $region41: #{prenorm_forward.1} parent=36 // loop_body
            %v563 = vld [vmem:[%s561] sm:%s554]
            %564 = vst [vmem:[%s562] sm:%s554] %v563
            %v565 = vld [vmem:[%s561 + $0x8] sm:%s554]
            %566 = vst [vmem:[%s562 + $0x8] sm:%s554] %v565
          $region42: #{prenorm_forward.1} parent=36 // loop_footer
            %s560 = sadd.s32 1, %s556
          $region43: #{prenorm_forward.1} parent=36 // loop_footer_branch
            %555 = sbr.rel target = $region39
          $region44: #{prenorm_forward.1} parent=36 // loop_exit
            _
        $region37: #{prenorm_forward.1} parent=28 // pred_fallthru
          _
      $region29: #{prenorm_forward.1} parent=24 // pred_fallthru
        _
      %583 = vnop
    $region25: #{prenorm_forward.1} parent=1 // pred_fallthru
      _
    // Predicated region
    $region60: #{prenorm_forward.1} parent=1 // pred_check
      _
    $region61: #{prenorm_forward.1} parent=1 // pred_check_branch
      %585 = sbr.rel (0) target = $region63
    $region62: #{prenorm_forward.1} parent=1 // pred_region
      _
    $region63: #{prenorm_forward.1} parent=1 // pred_fallthru
      _

</llo_original>
